<compile_context>
chip_gen: v5e
topology: v5e:2x2
jax: 0.10.0
libtpu: 0.0.40
codegen_flags: <defaults>
</compile_context>

<pallas_src>
import functools

import jax
import jax.numpy as jnp
from jax.experimental import pallas as pl
from jax.experimental.pallas import tpu as pltpu

BN_EPS = 1e-5
LANE = 128  # pad every feature dim to one full 128-lane vreg width

# Row layout of the packed small-parameter slab (each row zero-padded to LANE):
#   0: b1   1: g1   2: be1
#   3: b2   4: g2   5: be2
#   6: b3   7: g3   8: be3
#   9: b4
_N_PARAM_ROWS = 10


def _mlp_kernel(x_ref, w_ref, p_ref, o_ref, *, k1):
    """Whole MLP forward in one invocation.

    x_ref: (B, k1)       input (k1 = in_features rounded up to a sublane multiple)
    w_ref: (4, 128, 128) stacked zero-padded (in, out) weight matrices
    p_ref: (10, 128)     packed biases / BN gammas / BN betas (layout above)
    o_ref: (B, 128)      lane-dense output; real logits in the first lanes
    """
    x = x_ref[...]
    p = p_ref[...]  # single (10,128) load; rows broadcast over the batch axis

    def row(i):
        return p[i:i + 1, :]  # (1, 128)

    def linear(h, layer, bias_row, k=LANE):
        w = w_ref[layer] if k == LANE else w_ref[layer, :k, :]  # static slice
        return jnp.dot(h, w, preferred_element_type=jnp.float32) + row(bias_row)

    def batchnorm(h, gamma_row, beta_row):
        # Training-mode BatchNorm1d: batch mean + biased variance over axis 0,
        # single-pass sum / sum-of-squares form (independent XLU reductions).
        mean = jnp.mean(h, axis=0, keepdims=True)
        mean_sq = jnp.mean(h * h, axis=0, keepdims=True)
        var = mean_sq - mean * mean
        inv = jax.lax.rsqrt(var + BN_EPS)
        return (h - mean) * (inv * row(gamma_row)) + row(beta_row)

    h = jnp.tanh(linear(x, 0, 0, k=k1))
    h = batchnorm(h, 1, 2)
    h = jnp.maximum(linear(h, 1, 3), 0.0)
    h = batchnorm(h, 4, 5)
    h = jnp.maximum(linear(h, 2, 6), 0.0)
    h = batchnorm(h, 7, 8)
    o_ref[...] = linear(h, 3, 9)


def pack_params(params):
    """Zero-pad & pack all parameters into one weight stack + one vector slab.

    Call ONCE at init / after each optimizer step; the packed arrays are reused
    across forward calls (keeps ~15 pad/stack ops out of the per-step graph).

    NOTE: padded lanes MUST stay zero-padded (especially BN gammas): BN on an
    all-zero lane produces rsqrt(eps) ~ 316, which is only benign because it is
    multiplied by gamma == 0 on those lanes. Do not pad gammas with ones.
    """
    (w1, b1, g1, be1, w2, b2, g2, be2, w3, b3, g3, be3, w4, b4) = params
    for w in (w1, w2, w3, w4):
        assert w.shape[0] <= LANE and w.shape[1] <= LANE

    def pad_w(w):
        fi, fo = w.shape
        return jnp.zeros((LANE, LANE), jnp.float32).at[:fi, :fo].set(w)

    def pad_v(v):
        v = v.reshape(-1)
        return jnp.zeros((LANE,), jnp.float32).at[:v.shape[0]].set(v)

    w_stack = jnp.stack([pad_w(w1), pad_w(w2), pad_w(w3), pad_w(w4)])
    p_stack = jnp.stack([pad_v(b1), pad_v(g1), pad_v(be1),
                         pad_v(b2), pad_v(g2), pad_v(be2),
                         pad_v(b3), pad_v(g3), pad_v(be3),
                         pad_v(b4)])
    return w_stack, p_stack


def _vmem_limit_bytes(batch, k1):
    """Size the scoped VMEM limit from the batch; cap per chip generation."""
    # Resident footprint: x + padded out + a handful of live (B,128) temps + params.
    needed = 4 * (batch * k1 + 7 * batch * LANE
                  + 4 * LANE * LANE + _N_PARAM_ROWS * LANE)
    limit = 2 * needed + (2 << 20)
    try:
        # 64 MiB physical on v7x vs 128 MiB on v5e/v6e -> gate the ceiling on chip.
        cap = int(pltpu.get_tpu_info().vmem_capacity_bytes * 3 // 4)
    except Exception:  # pragma: no cover - conservative, v7x-safe fallback
        cap = 32 << 20
    return max(4 << 20, min(limit, cap))


@functools.partial(jax.jit, static_argnames=("output_shape",))
def mlp_forward(x, w_stack, p_stack, output_shape):
    """Forward pass. `w_stack`/`p_stack` come from pack_params (done once)."""
    batch, in_features = x.shape
    assert in_features <= LANE
    # Round the contraction dim of the first matmul up to a sublane multiple.
    k1 = -(-in_features // 8) * 8
    if k1 != in_features:
        x = jnp.pad(x, ((0, 0), (0, k1 - in_features)))

    # Advisory cost hint for the XLA scheduler (tiny fixed-overhead custom call).
    flops = 2 * batch * (k1 * LANE + 3 * LANE * LANE) + 16 * batch * LANE
    transcendentals = batch * LANE + 3 * LANE          # tanh + 3x rsqrt
    bytes_accessed = 4 * (batch * (k1 + LANE)
                          + 4 * LANE * LANE + _N_PARAM_ROWS * LANE)

    vmem_spec = pl.BlockSpec(memory_space=pltpu.MemorySpace.VMEM)
    out_pad = pl.pallas_call(
        functools.partial(_mlp_kernel, k1=k1),
        out_shape=jax.ShapeDtypeStruct((batch, LANE), jnp.float32),
        in_specs=[vmem_spec, vmem_spec, vmem_spec],
        out_specs=vmem_spec,
        compiler_params=pltpu.CompilerParams(
            vmem_limit_bytes=_vmem_limit_bytes(batch, k1)),
        cost_estimate=pl.CostEstimate(flops=flops,
                                      transcendentals=transcendentals,
                                      bytes_accessed=bytes_accessed),
    )(x, w_stack, p_stack)
    # Lane-dense store + wrapper slice is the right call at small B; for a future
    # large-batch tiled version keep the slice fused into the consumer instead.
    return out_pad[:, :output_shape]


def init_params(key, input_shape, output_shape):
    """Deterministic init mirroring PyTorch defaults:
    Linear: W, b ~ U(-1/sqrt(fan_in), 1/sqrt(fan_in)); BatchNorm: gamma=1, beta=0.
    Linear weights are stored transposed as (in, out) for the kernel."""
    dims = [(input_shape, 8), (8, 64), (64, 8), (8, output_shape)]
    params = []
    for i, (fan_in, fan_out) in enumerate(dims):
        key, kw, kb = jax.random.split(key, 3)
        bound = 1.0 / jnp.sqrt(float(fan_in))
        w = jax.random.uniform(kw, (fan_in, fan_out), jnp.float32, -bound, bound)
        b = jax.random.uniform(kb, (1, fan_out), jnp.float32, -bound, bound)
        params.extend([w, b])
        if i < 3:  # BN after the first three linears
            params.extend([jnp.ones((1, fan_out), jnp.float32),
                           jnp.zeros((1, fan_out), jnp.float32)])
    return tuple(params)


def mlp_reference(x, params):
    """Pure-JAX reference (PyTorch training-mode BN semantics)."""
    (w1, b1, g1, be1, w2, b2, g2, be2, w3, b3, g3, be3, w4, b4) = params

    def bn(h, g, be):
        m = jnp.mean(h, axis=0, keepdims=True)
        v = jnp.mean((h - m) ** 2, axis=0, keepdims=True)
        return (h - m) * jax.lax.rsqrt(v + BN_EPS) * g + be

    h = jnp.tanh(x @ w1 + b1)
    h = bn(h, g1, be1)
    h = jax.nn.relu(h @ w2 + b2)
    h = bn(h, g2, be2)
    h = jax.nn.relu(h @ w3 + b3)
    h = bn(h, g3, be3)
    return h @ w4 + b4


if __name__ == "__main__":
    input_shape = 16
    output_shape = 4
    batch = 8

    key = jax.random.PRNGKey(0)
    key, kx = jax.random.split(key)
    x = jax.random.normal(kx, (batch, input_shape), jnp.float32)
    params = init_params(key, input_shape, output_shape)

    # Pack/pad parameters ONCE (outside the hot path); reuse across steps.
    w_stack, p_stack = jax.block_until_ready(pack_params(params))

    out = mlp_forward(x, w_stack, p_stack, output_shape)
    out = jax.block_until_ready(out)

    ref = mlp_reference(x, params)
    assert out.shape == (batch, output_shape)
    assert jnp.allclose(out, ref, atol=1e-4, rtol=1e-4), "mismatch vs JAX reference"

    print("KERNEL_OK")
</pallas_src>

<mosaic_0001>
module attributes {stable_mosaic.version = 11 : i64} {
  func.func @_mlp_kernel(%arg0: memref<8x16xf32, #tpu.memory_space<vmem>>, %arg1: memref<4x128x128xf32, #tpu.memory_space<vmem>>, %arg2: memref<10x128xf32, #tpu.memory_space<vmem>>, %arg3: memref<8x128xf32, #tpu.memory_space<vmem>>) attributes {dimension_semantics = [], scalar_prefetch = 0 : i64, scratch_operands = 0 : i64, tpu.core_type = #tpu.core_type<tc>} {
    %c0 = arith.constant 0 : index
    %c0_0 = arith.constant 0 : index
    %0 = vector.load %arg0[%c0, %c0_0] : memref<8x16xf32, #tpu.memory_space<vmem>>, vector<8x16xf32>
    %c0_1 = arith.constant 0 : index
    %c0_2 = arith.constant 0 : index
    %1 = vector.load %arg2[%c0_1, %c0_2] : memref<10x128xf32, #tpu.memory_space<vmem>>, vector<10x128xf32>
    %c0_3 = arith.constant 0 : index
    %c0_4 = arith.constant 0 : index
    %c0_5 = arith.constant 0 : index
    %2 = vector.load %arg1[%c0_3, %c0_4, %c0_5] : memref<4x128x128xf32, #tpu.memory_space<vmem>>, vector<1x16x128xf32>
    %3 = vector.shape_cast %2 : vector<1x16x128xf32> to vector<16x128xf32>
    %cst = arith.constant dense<0.000000e+00> : vector<8x128xf32>
    %4 = tpu.matmul %0, %3, %cst {dimension_numbers = #tpu.dot_dimension_numbers<[1], [0], [0], [1], [0, 0, 1, 1], [], []>} : vector<8x16xf32>, vector<16x128xf32>, vector<8x128xf32> -> vector<8x128xf32>
    %5 = vector.extract_strided_slice %1 {offsets = [0, 0], sizes = [1, 128], strides = [1, 1]} : vector<10x128xf32> to vector<1x128xf32>
    %6 = vector.broadcast %5 : vector<1x128xf32> to vector<8x128xf32>
    %7 = arith.addf %4, %6 : vector<8x128xf32>
    %8 = math.tanh %7 : vector<8x128xf32>
    %cst_6 = arith.constant dense<0.000000e+00> : vector<128xf32>
    %9 = vector.multi_reduction <add>, %8, %cst_6 [0] : vector<8x128xf32> to vector<128xf32>
    %10 = vector.shape_cast %9 : vector<128xf32> to vector<1x128xf32>
    %cst_7 = arith.constant 8.000000e+00 : f32
    %11 = vector.broadcast %cst_7 : f32 to vector<1x128xf32>
    %12 = arith.divf %10, %11 : vector<1x128xf32>
    %13 = arith.mulf %8, %8 : vector<8x128xf32>
    %cst_8 = arith.constant dense<0.000000e+00> : vector<128xf32>
    %14 = vector.multi_reduction <add>, %13, %cst_8 [0] : vector<8x128xf32> to vector<128xf32>
    %15 = vector.shape_cast %14 : vector<128xf32> to vector<1x128xf32>
    %cst_9 = arith.constant 8.000000e+00 : f32
    %16 = vector.broadcast %cst_9 : f32 to vector<1x128xf32>
    %17 = arith.divf %15, %16 : vector<1x128xf32>
    %18 = arith.mulf %12, %12 : vector<1x128xf32>
    %19 = arith.subf %17, %18 : vector<1x128xf32>
    %cst_10 = arith.constant 9.99999974E-6 : f32
    %20 = vector.broadcast %cst_10 : f32 to vector<1x128xf32>
    %21 = arith.addf %19, %20 : vector<1x128xf32>
    %22 = math.rsqrt %21 : vector<1x128xf32>
    %23 = vector.broadcast %12 : vector<1x128xf32> to vector<8x128xf32>
    %24 = arith.subf %8, %23 : vector<8x128xf32>
    %25 = vector.extract_strided_slice %1 {offsets = [1, 0], sizes = [1, 128], strides = [1, 1]} : vector<10x128xf32> to vector<1x128xf32>
    %26 = arith.mulf %22, %25 : vector<1x128xf32>
    %27 = vector.broadcast %26 : vector<1x128xf32> to vector<8x128xf32>
    %28 = arith.mulf %24, %27 : vector<8x128xf32>
    %29 = vector.extract_strided_slice %1 {offsets = [2, 0], sizes = [1, 128], strides = [1, 1]} : vector<10x128xf32> to vector<1x128xf32>
    %30 = vector.broadcast %29 : vector<1x128xf32> to vector<8x128xf32>
    %31 = arith.addf %28, %30 : vector<8x128xf32>
    %c1 = arith.constant 1 : index
    %c0_11 = arith.constant 0 : index
    %c0_12 = arith.constant 0 : index
    %32 = vector.load %arg1[%c1, %c0_11, %c0_12] : memref<4x128x128xf32, #tpu.memory_space<vmem>>, vector<1x128x128xf32>
    %33 = vector.shape_cast %32 : vector<1x128x128xf32> to vector<128x128xf32>
    %cst_13 = arith.constant dense<0.000000e+00> : vector<8x128xf32>
    %34 = tpu.matmul %31, %33, %cst_13 {dimension_numbers = #tpu.dot_dimension_numbers<[1], [0], [0], [1], [0, 0, 1, 1], [], []>} : vector<8x128xf32>, vector<128x128xf32>, vector<8x128xf32> -> vector<8x128xf32>
    %35 = vector.extract_strided_slice %1 {offsets = [3, 0], sizes = [1, 128], strides = [1, 1]} : vector<10x128xf32> to vector<1x128xf32>
    %36 = vector.broadcast %35 : vector<1x128xf32> to vector<8x128xf32>
    %37 = arith.addf %34, %36 : vector<8x128xf32>
    %cst_14 = arith.constant 0.000000e+00 : f32
    %38 = vector.broadcast %cst_14 : f32 to vector<8x128xf32>
    %39 = arith.maximumf %37, %38 : vector<8x128xf32>
    %cst_15 = arith.constant dense<0.000000e+00> : vector<128xf32>
    %40 = vector.multi_reduction <add>, %39, %cst_15 [0] : vector<8x128xf32> to vector<128xf32>
    %41 = vector.shape_cast %40 : vector<128xf32> to vector<1x128xf32>
    %cst_16 = arith.constant 8.000000e+00 : f32
    %42 = vector.broadcast %cst_16 : f32 to vector<1x128xf32>
    %43 = arith.divf %41, %42 : vector<1x128xf32>
    %44 = arith.mulf %39, %39 : vector<8x128xf32>
    %cst_17 = arith.constant dense<0.000000e+00> : vector<128xf32>
    %45 = vector.multi_reduction <add>, %44, %cst_17 [0] : vector<8x128xf32> to vector<128xf32>
    %46 = vector.shape_cast %45 : vector<128xf32> to vector<1x128xf32>
    %cst_18 = arith.constant 8.000000e+00 : f32
    %47 = vector.broadcast %cst_18 : f32 to vector<1x128xf32>
    %48 = arith.divf %46, %47 : vector<1x128xf32>
    %49 = arith.mulf %43, %43 : vector<1x128xf32>
    %50 = arith.subf %48, %49 : vector<1x128xf32>
    %cst_19 = arith.constant 9.99999974E-6 : f32
    %51 = vector.broadcast %cst_19 : f32 to vector<1x128xf32>
    %52 = arith.addf %50, %51 : vector<1x128xf32>
    %53 = math.rsqrt %52 : vector<1x128xf32>
    %54 = vector.broadcast %43 : vector<1x128xf32> to vector<8x128xf32>
    %55 = arith.subf %39, %54 : vector<8x128xf32>
    %56 = vector.extract_strided_slice %1 {offsets = [4, 0], sizes = [1, 128], strides = [1, 1]} : vector<10x128xf32> to vector<1x128xf32>
    %57 = arith.mulf %53, %56 : vector<1x128xf32>
    %58 = vector.broadcast %57 : vector<1x128xf32> to vector<8x128xf32>
    %59 = arith.mulf %55, %58 : vector<8x128xf32>
    %60 = vector.extract_strided_slice %1 {offsets = [5, 0], sizes = [1, 128], strides = [1, 1]} : vector<10x128xf32> to vector<1x128xf32>
    %61 = vector.broadcast %60 : vector<1x128xf32> to vector<8x128xf32>
    %62 = arith.addf %59, %61 : vector<8x128xf32>
    %c2 = arith.constant 2 : index
    %c0_20 = arith.constant 0 : index
    %c0_21 = arith.constant 0 : index
    %63 = vector.load %arg1[%c2, %c0_20, %c0_21] : memref<4x128x128xf32, #tpu.memory_space<vmem>>, vector<1x128x128xf32>
    %64 = vector.shape_cast %63 : vector<1x128x128xf32> to vector<128x128xf32>
    %cst_22 = arith.constant dense<0.000000e+00> : vector<8x128xf32>
    %65 = tpu.matmul %62, %64, %cst_22 {dimension_numbers = #tpu.dot_dimension_numbers<[1], [0], [0], [1], [0, 0, 1, 1], [], []>} : vector<8x128xf32>, vector<128x128xf32>, vector<8x128xf32> -> vector<8x128xf32>
    %66 = vector.extract_strided_slice %1 {offsets = [6, 0], sizes = [1, 128], strides = [1, 1]} : vector<10x128xf32> to vector<1x128xf32>
    %67 = vector.broadcast %66 : vector<1x128xf32> to vector<8x128xf32>
    %68 = arith.addf %65, %67 : vector<8x128xf32>
    %cst_23 = arith.constant 0.000000e+00 : f32
    %69 = vector.broadcast %cst_23 : f32 to vector<8x128xf32>
    %70 = arith.maximumf %68, %69 : vector<8x128xf32>
    %cst_24 = arith.constant dense<0.000000e+00> : vector<128xf32>
    %71 = vector.multi_reduction <add>, %70, %cst_24 [0] : vector<8x128xf32> to vector<128xf32>
    %72 = vector.shape_cast %71 : vector<128xf32> to vector<1x128xf32>
    %cst_25 = arith.constant 8.000000e+00 : f32
    %73 = vector.broadcast %cst_25 : f32 to vector<1x128xf32>
    %74 = arith.divf %72, %73 : vector<1x128xf32>
    %75 = arith.mulf %70, %70 : vector<8x128xf32>
    %cst_26 = arith.constant dense<0.000000e+00> : vector<128xf32>
    %76 = vector.multi_reduction <add>, %75, %cst_26 [0] : vector<8x128xf32> to vector<128xf32>
    %77 = vector.shape_cast %76 : vector<128xf32> to vector<1x128xf32>
    %cst_27 = arith.constant 8.000000e+00 : f32
    %78 = vector.broadcast %cst_27 : f32 to vector<1x128xf32>
    %79 = arith.divf %77, %78 : vector<1x128xf32>
    %80 = arith.mulf %74, %74 : vector<1x128xf32>
    %81 = arith.subf %79, %80 : vector<1x128xf32>
    %cst_28 = arith.constant 9.99999974E-6 : f32
    %82 = vector.broadcast %cst_28 : f32 to vector<1x128xf32>
    %83 = arith.addf %81, %82 : vector<1x128xf32>
    %84 = math.rsqrt %83 : vector<1x128xf32>
    %85 = vector.broadcast %74 : vector<1x128xf32> to vector<8x128xf32>
    %86 = arith.subf %70, %85 : vector<8x128xf32>
    %87 = vector.extract_strided_slice %1 {offsets = [7, 0], sizes = [1, 128], strides = [1, 1]} : vector<10x128xf32> to vector<1x128xf32>
    %88 = arith.mulf %84, %87 : vector<1x128xf32>
    %89 = vector.broadcast %88 : vector<1x128xf32> to vector<8x128xf32>
    %90 = arith.mulf %86, %89 : vector<8x128xf32>
    %91 = vector.extract_strided_slice %1 {offsets = [8, 0], sizes = [1, 128], strides = [1, 1]} : vector<10x128xf32> to vector<1x128xf32>
    %92 = vector.broadcast %91 : vector<1x128xf32> to vector<8x128xf32>
    %93 = arith.addf %90, %92 : vector<8x128xf32>
    %c3 = arith.constant 3 : index
    %c0_29 = arith.constant 0 : index
    %c0_30 = arith.constant 0 : index
    %94 = vector.load %arg1[%c3, %c0_29, %c0_30] : memref<4x128x128xf32, #tpu.memory_space<vmem>>, vector<1x128x128xf32>
    %95 = vector.shape_cast %94 : vector<1x128x128xf32> to vector<128x128xf32>
    %cst_31 = arith.constant dense<0.000000e+00> : vector<8x128xf32>
    %96 = tpu.matmul %93, %95, %cst_31 {dimension_numbers = #tpu.dot_dimension_numbers<[1], [0], [0], [1], [0, 0, 1, 1], [], []>} : vector<8x128xf32>, vector<128x128xf32>, vector<8x128xf32> -> vector<8x128xf32>
    %97 = vector.extract_strided_slice %1 {offsets = [9, 0], sizes = [1, 128], strides = [1, 1]} : vector<10x128xf32> to vector<1x128xf32>
    %98 = vector.broadcast %97 : vector<1x128xf32> to vector<8x128xf32>
    %99 = arith.addf %96, %98 : vector<8x128xf32>
    %c0_32 = arith.constant 0 : index
    %c0_33 = arith.constant 0 : index
    %100 = vector.load %arg3[%c0_32, %c0_33] : memref<8x128xf32, #tpu.memory_space<vmem>>, vector<8x128xf32>
    tpu.vector_store %arg3[%c0_32, %c0_33], %99 {strides = array<i32>} : memref<8x128xf32, #tpu.memory_space<vmem>>, vector<8x128xf32>,
    return
  }
}

</mosaic_0001>

<llo_original>
// kernel: mlp_forward.1
$region0: #{mlp_forward.1}
  #allocation0 [shape = 'u32[]', space=smem, size = 0x4, offset = 0x4, fixed_abs, tag = 'smem constant byte address 0x4 - core index']
  #allocation1 [shape = 'u32[72,128]{1,0:T(1,128)}', space=vmem, size = 0x9000, scoped, tag = 'internal scratch']
  %s0 = inlined_call_operand.hbm [shape: f32[8,16], index: 0, kind: input, shape index: {}]
  %s1 = inlined_call_operand.hbm [shape: f32[4,128,128], index: 1, kind: input, shape index: {}]
  %s2 = inlined_call_operand.hbm [shape: f32[10,128], index: 2, kind: input, shape index: {}]
  %s3 = inlined_call_operand.vmem [shape: f32[8,128], index: 3, kind: output, shape index: {}]
  %s4 = sld [smem:[#allocation0]]
  $region34: #{mlp_forward.1} parent=0
    _
  %s6 = ssub.s32 1, %s4
  %s7 = scalar_select 0, %s6, %s4
  $region1: #{mlp_forward.1} parent=0
    #allocation2 [shape = 'u8[4096]{0}', space=vmem, size = 0x1000, scoped, tag = 'input window, operand 0, single buffered']
    #allocation3 [shape = 's32[1]{0}', space=sflag, size = 0x4, scoped, tag = 'scoped memory for mlp_forward.1']
    #allocation4 [shape = 'u8[262144]{0}', space=vmem, size = 0x40000, scoped, tag = 'input window, operand 1, single buffered']
    #allocation5 [shape = 's32[1]{0}', space=sflag, size = 0x4, scoped, tag = 'scoped memory for mlp_forward.1']
    #allocation6 [shape = 'u8[8192]{0}', space=vmem, size = 0x2000, scoped, tag = 'input window, operand 2, single buffered']
    %8 = vsyncpa [#allocation3], 0
    %9 = vsyncpa [#allocation5], 0
    // Predicated region
    $region2: #{mlp_forward.1} parent=1 // pred_check
      _
    $region3: #{mlp_forward.1} parent=1 // pred_check_branch
      %11 = sbr.rel (0) target = $region5
    $region4: #{mlp_forward.1} parent=1 // pred_region
      %13 = vsyncadd [#allocation3], 0
      %s15 = sshll.u32 %s0, 4
      %s16 = int_to_ptr.hbm [resolvable:$true] %s15
      %s17 = sshll.u32 [#allocation2], 4
      %s18 = int_to_ptr.vmem [resolvable:$true] %s17
      %20 = dma.hbm_to_vmem [thread:$0]  %s16, 128, %s18, [#allocation3]
    $region5: #{mlp_forward.1} parent=1 // pred_fallthru
      _
    // Predicated region
    $region6: #{mlp_forward.1} parent=1 // pred_check
      _
    $region7: #{mlp_forward.1} parent=1 // pred_check_branch
      %22 = sbr.rel (0) target = $region9
    $region8: #{mlp_forward.1} parent=1 // pred_region
      %24 = vsyncadd [#allocation5], 0
      %s25 = sshll.u32 %s1, 4
      %s26 = int_to_ptr.hbm [resolvable:$true] %s25
      %s27 = sshll.u32 [#allocation4], 4
      %s28 = int_to_ptr.vmem [resolvable:$true] %s27
      %33 = dma.hbm_to_vmem [thread:$0]  %s26, 8192, %s28, [#allocation5], 128, 128, 8
    $region9: #{mlp_forward.1} parent=1 // pred_fallthru
      _
    // Predicated region
    $region10: #{mlp_forward.1} parent=1 // pred_check
      _
    $region11: #{mlp_forward.1} parent=1 // pred_check_branch
      %35 = sbr.rel (0) target = $region13
    $region12: #{mlp_forward.1} parent=1 // pred_region
      %37 = vsyncadd [#allocation5], 0
      %s38 = sshll.u32 %s2, 4
      %s39 = int_to_ptr.hbm [resolvable:$true] %s38
      %s40 = sshll.u32 [#allocation6], 4
      %s41 = int_to_ptr.vmem [resolvable:$true] %s40
      %46 = dma.hbm_to_vmem [thread:$0]  %s39, 256, %s41, [#allocation5], 128, 128, 8
    $region13: #{mlp_forward.1} parent=1 // pred_fallthru
      _
    // Predicated region
    $region14: #{mlp_forward.1} parent=1 // pred_check
      _
    $region15: #{mlp_forward.1} parent=1 // pred_check_branch
      %48 = sbr.rel (0) target = $region17
    $region16: #{mlp_forward.1} parent=1 // pred_region
      %50 = dma.done [#allocation3], 128
    $region17: #{mlp_forward.1} parent=1 // pred_fallthru
      _
    // Predicated region
    $region18: #{mlp_forward.1} parent=1 // pred_check
      _
    $region19: #{mlp_forward.1} parent=1 // pred_check_branch
      %52 = sbr.rel (0) target = $region21
    $region20: #{mlp_forward.1} parent=1 // pred_region
      %54 = dma.done [#allocation5], 8192
    $region21: #{mlp_forward.1} parent=1 // pred_fallthru
      _
    // Predicated region
    $region22: #{mlp_forward.1} parent=1 // pred_check
      _
    $region23: #{mlp_forward.1} parent=1 // pred_check_branch
      %56 = sbr.rel (0) target = $region25
    $region24: #{mlp_forward.1} parent=1 // pred_region
      %58 = dma.done [#allocation5], 256
    $region25: #{mlp_forward.1} parent=1 // pred_fallthru
      _
    %v59 = vld [vmem:[#allocation2] sm:$0xff]
    %v60 = vld [vmem:[#allocation6] sm:$0xff]
    %v61 = vld [vmem:[#allocation6 + $0x8] sm:$0x3]
    %v62 = vld [vmem:[#allocation4] sm:$0xff]
    %v63 = vld [vmem:[#allocation4 + $0x8] sm:$0xff]
    %v64 = vperm.slane %v60, 0
    %vm65 = vcmask 130048
    %v67 = vsel %vm65, %v59, 0
    %69 = vmatpush.msra.mxu0 0.0
    %70 = vmatpush.msra.mxu0 0.0
    %71 = vmatpush.msra.mxu0 0.0
    %72 = vmatpush.msra.mxu0 0.0
    %73 = vmatpush.msra.mxu0 0.0
    %74 = vmatpush.msra.mxu0 0.0
    %75 = vmatpush.msra.mxu0 0.0
    %76 = vmatpush.msra.mxu0 0.0
    %77 = vmatpush.msra.mxu0 0.0
    %78 = vmatpush.msra.mxu0 0.0
    %79 = vmatpush.msra.mxu0 0.0
    %80 = vmatpush.msra.mxu0 0.0
    %81 = vmatpush.msra.mxu0 0.0
    %82 = vmatpush.msra.mxu0 0.0
    %83 = vmatpush.msra.mxu0 %v63
    %84 = vmatpush.msra.mxu0 %v62
    %85 = vmatmul.f32.gmra.mxu0 %v67
    %v86 = vpop.f32.mrf.mxu0
    %v87 = vadd.f32 %v64, %v86
    %88 = vdwg.mxu0
    %v89 = vtanh.pop %v87
    %v90 = vrot.slane %v89, 4
    %v91 = vadd.f32 %v89, %v90
    %v92 = vrot.slane %v91, 2
    %v93 = vadd.f32 %v91, %v92
    %v94 = vrot.slane %v93, 1
    %v95 = vadd.f32 %v93, %v94
    %v96 = vrcp.pop 8.0
    %v97 = vmul.f32 8.0, %v96
    %v98 = vsub.f32 1.0, %v97
    %v99 = vmul.f32 %v96, %v98
    %v100 = vadd.f32 %v96, %v99
    %vm101 = vweird.f32 %v96
    %v102 = vsel %vm101, %v96, %v100
    %v103 = vmul.f32 %v95, %v102
    %v104 = vmul.f32 %v89, %v89
    %v105 = vrot.slane %v104, 4
    %v106 = vadd.f32 %v104, %v105
    %v107 = vrot.slane %v106, 2
    %v108 = vadd.f32 %v106, %v107
    %v109 = vrot.slane %v108, 1
    %v110 = vadd.f32 %v108, %v109
    %v111 = vmul.f32 %v110, %v102
    %v112 = vmul.f32 %v103, %v103
    %v113 = vsub.f32 %v111, %v112
    %v114 = vadd.f32 %v113, 1e-05
    %v115 = vrsqrt.pop %v114
    %v116 = vmul.f32 %v115, %v114
    %v117 = vmul.f32 %v116, %v115
    %v118 = vmul.f32 0.5, %v117
    %v119 = vsub.f32 1.5, %v118
    %v120 = vmul.f32 %v115, %v119
    %vm121 = vweird.f32 %v114
    %vm122 = vweird.f32 %v115
    %vm123 = vmor %vm121, %vm122
    %v124 = vsel %vm123, %v115, %v120
    %v125 = vsub.f32 %v89, %v103
    %v126 = vmul.f32 %v124, %v60
    %v127 = vperm.slane %v126, 1
    %v128 = vmul.f32 %v125, %v127
    %v129 = vperm.slane %v60, 2
    %v130 = vadd.f32 %v128, %v129
    %s131 = scalar_lea.vmem [#allocation4], 128
    %v132 = vld [vmem:[%s131] sm:$0xff]
    %v133 = vld [vmem:[%s131 + $0x8] sm:$0xff]
    %v134 = vld [vmem:[%s131 + $0x10] sm:$0xff]
    %v135 = vld [vmem:[%s131 + $0x18] sm:$0xff]
    %v136 = vld [vmem:[%s131 + $0x20] sm:$0xff]
    %v137 = vld [vmem:[%s131 + $0x28] sm:$0xff]
    %v138 = vld [vmem:[%s131 + $0x30] sm:$0xff]
    %v139 = vld [vmem:[%s131 + $0x38] sm:$0xff]
    %v140 = vld [vmem:[%s131 + $0x40] sm:$0xff]
    %v141 = vld [vmem:[%s131 + $0x48] sm:$0xff]
    %v142 = vld [vmem:[%s131 + $0x50] sm:$0xff]
    %v143 = vld [vmem:[%s131 + $0x58] sm:$0xff]
    %v144 = vld [vmem:[%s131 + $0x60] sm:$0xff]
    %v145 = vld [vmem:[%s131 + $0x68] sm:$0xff]
    %v146 = vld [vmem:[%s131 + $0x70] sm:$0xff]
    %v147 = vld [vmem:[%s131 + $0x78] sm:$0xff]
    %v148 = vperm.slane %v60, 3
    %149 = vmatpush.msra.mxu0 %v147
    %150 = vmatpush.msra.mxu0 %v146
    %151 = vmatpush.msra.mxu0 %v145
    %152 = vmatpush.msra.mxu0 %v144
    %153 = vmatpush.msra.mxu0 %v143
    %154 = vmatpush.msra.mxu0 %v142
    %155 = vmatpush.msra.mxu0 %v141
    %156 = vmatpush.msra.mxu0 %v140
    %157 = vmatpush.msra.mxu0 %v139
    %158 = vmatpush.msra.mxu0 %v138
    %159 = vmatpush.msra.mxu0 %v137
    %160 = vmatpush.msra.mxu0 %v136
    %161 = vmatpush.msra.mxu0 %v135
    %162 = vmatpush.msra.mxu0 %v134
    %163 = vmatpush.msra.mxu0 %v133
    %164 = vmatpush.msra.mxu0 %v132
    %165 = vmatmul.f32.gmra.mxu0 %v130
    %v166 = vpop.f32.mrf.mxu0
    %v167 = vadd.f32 %v148, %v166
    %168 = vdwg.mxu0
    %v169 = vmax.f32 %v167, 0.0
    %v170 = vrot.slane %v169, 4
    %v171 = vadd.f32 %v169, %v170
    %v172 = vrot.slane %v171, 2
    %v173 = vadd.f32 %v171, %v172
    %v174 = vrot.slane %v173, 1
    %v175 = vadd.f32 %v173, %v174
    %v176 = vmul.f32 %v175, %v102
    %v177 = vmul.f32 %v169, %v169
    %v178 = vrot.slane %v177, 4
    %v179 = vadd.f32 %v177, %v178
    %v180 = vrot.slane %v179, 2
    %v181 = vadd.f32 %v179, %v180
    %v182 = vrot.slane %v181, 1
    %v183 = vadd.f32 %v181, %v182
    %v184 = vmul.f32 %v183, %v102
    %v185 = vmul.f32 %v176, %v176
    %v186 = vsub.f32 %v184, %v185
    %v187 = vadd.f32 %v186, 1e-05
    %v188 = vrsqrt.pop %v187
    %v189 = vmul.f32 %v188, %v187
    %v190 = vmul.f32 %v189, %v188
    %v191 = vmul.f32 0.5, %v190
    %v192 = vsub.f32 1.5, %v191
    %v193 = vmul.f32 %v188, %v192
    %vm194 = vweird.f32 %v187
    %vm195 = vweird.f32 %v188
    %vm196 = vmor %vm194, %vm195
    %v197 = vsel %vm196, %v188, %v193
    %v198 = vsub.f32 %v169, %v176
    %v199 = vmul.f32 %v197, %v60
    %v200 = vperm.slane %v199, 4
    %v201 = vmul.f32 %v198, %v200
    %v202 = vperm.slane %v60, 5
    %v203 = vadd.f32 %v201, %v202
    %s204 = scalar_lea.vmem [#allocation4], 256
    %v205 = vld [vmem:[%s204] sm:$0xff]
    %v206 = vld [vmem:[%s204 + $0x8] sm:$0xff]
    %v207 = vld [vmem:[%s204 + $0x10] sm:$0xff]
    %v208 = vld [vmem:[%s204 + $0x18] sm:$0xff]
    %v209 = vld [vmem:[%s204 + $0x20] sm:$0xff]
    %v210 = vld [vmem:[%s204 + $0x28] sm:$0xff]
    %v211 = vld [vmem:[%s204 + $0x30] sm:$0xff]
    %v212 = vld [vmem:[%s204 + $0x38] sm:$0xff]
    %v213 = vld [vmem:[%s204 + $0x40] sm:$0xff]
    %v214 = vld [vmem:[%s204 + $0x48] sm:$0xff]
    %v215 = vld [vmem:[%s204 + $0x50] sm:$0xff]
    %v216 = vld [vmem:[%s204 + $0x58] sm:$0xff]
    %v217 = vld [vmem:[%s204 + $0x60] sm:$0xff]
    %v218 = vld [vmem:[%s204 + $0x68] sm:$0xff]
    %v219 = vld [vmem:[%s204 + $0x70] sm:$0xff]
    %v220 = vld [vmem:[%s204 + $0x78] sm:$0xff]
    %v221 = vperm.slane %v60, 6
    %222 = vmatpush.msra.mxu0 %v220
    %223 = vmatpush.msra.mxu0 %v219
    %224 = vmatpush.msra.mxu0 %v218
    %225 = vmatpush.msra.mxu0 %v217
    %226 = vmatpush.msra.mxu0 %v216
    %227 = vmatpush.msra.mxu0 %v215
    %228 = vmatpush.msra.mxu0 %v214
    %229 = vmatpush.msra.mxu0 %v213
    %230 = vmatpush.msra.mxu0 %v212
    %231 = vmatpush.msra.mxu0 %v211
    %232 = vmatpush.msra.mxu0 %v210
    %233 = vmatpush.msra.mxu0 %v209
    %234 = vmatpush.msra.mxu0 %v208
    %235 = vmatpush.msra.mxu0 %v207
    %236 = vmatpush.msra.mxu0 %v206
    %237 = vmatpush.msra.mxu0 %v205
    %238 = vmatmul.f32.gmra.mxu0 %v203
    %v239 = vpop.f32.mrf.mxu0
    %v240 = vadd.f32 %v221, %v239
    %241 = vdwg.mxu0
    %v242 = vmax.f32 %v240, 0.0
    %v243 = vrot.slane %v242, 4
    %v244 = vadd.f32 %v242, %v243
    %v245 = vrot.slane %v244, 2
    %v246 = vadd.f32 %v244, %v245
    %v247 = vrot.slane %v246, 1
    %v248 = vadd.f32 %v246, %v247
    %v249 = vmul.f32 %v248, %v102
    %v250 = vmul.f32 %v242, %v242
    %v251 = vrot.slane %v250, 4
    %v252 = vadd.f32 %v250, %v251
    %v253 = vrot.slane %v252, 2
    %v254 = vadd.f32 %v252, %v253
    %v255 = vrot.slane %v254, 1
    %v256 = vadd.f32 %v254, %v255
    %v257 = vmul.f32 %v256, %v102
    %v258 = vmul.f32 %v249, %v249
    %v259 = vsub.f32 %v257, %v258
    %v260 = vadd.f32 %v259, 1e-05
    %v261 = vrsqrt.pop %v260
    %v262 = vmul.f32 %v261, %v260
    %v263 = vmul.f32 %v262, %v261
    %v264 = vmul.f32 0.5, %v263
    %v265 = vsub.f32 1.5, %v264
    %v266 = vmul.f32 %v261, %v265
    %vm267 = vweird.f32 %v260
    %vm268 = vweird.f32 %v261
    %vm269 = vmor %vm267, %vm268
    %v270 = vsel %vm269, %v261, %v266
    %v271 = vsub.f32 %v242, %v249
    %v272 = vmul.f32 %v270, %v60
    %v273 = vperm.slane %v272, 7
    %v274 = vmul.f32 %v271, %v273
    %v275 = vperm.slane %v61, 0
    %v276 = vadd.f32 %v274, %v275
    %s277 = scalar_lea.vmem [#allocation4], 384
    %v278 = vld [vmem:[%s277] sm:$0xff]
    %v279 = vld [vmem:[%s277 + $0x8] sm:$0xff]
    %v280 = vld [vmem:[%s277 + $0x10] sm:$0xff]
    %v281 = vld [vmem:[%s277 + $0x18] sm:$0xff]
    %v282 = vld [vmem:[%s277 + $0x20] sm:$0xff]
    %v283 = vld [vmem:[%s277 + $0x28] sm:$0xff]
    %v284 = vld [vmem:[%s277 + $0x30] sm:$0xff]
    %v285 = vld [vmem:[%s277 + $0x38] sm:$0xff]
    %v286 = vld [vmem:[%s277 + $0x40] sm:$0xff]
    %v287 = vld [vmem:[%s277 + $0x48] sm:$0xff]
    %v288 = vld [vmem:[%s277 + $0x50] sm:$0xff]
    %v289 = vld [vmem:[%s277 + $0x58] sm:$0xff]
    %v290 = vld [vmem:[%s277 + $0x60] sm:$0xff]
    %v291 = vld [vmem:[%s277 + $0x68] sm:$0xff]
    %v292 = vld [vmem:[%s277 + $0x70] sm:$0xff]
    %v293 = vld [vmem:[%s277 + $0x78] sm:$0xff]
    %v294 = vperm.slane %v61, 1
    %295 = vmatpush.msra.mxu0 %v293
    %296 = vmatpush.msra.mxu0 %v292
    %297 = vmatpush.msra.mxu0 %v291
    %298 = vmatpush.msra.mxu0 %v290
    %299 = vmatpush.msra.mxu0 %v289
    %300 = vmatpush.msra.mxu0 %v288
    %301 = vmatpush.msra.mxu0 %v287
    %302 = vmatpush.msra.mxu0 %v286
    %303 = vmatpush.msra.mxu0 %v285
    %304 = vmatpush.msra.mxu0 %v284
    %305 = vmatpush.msra.mxu0 %v283
    %306 = vmatpush.msra.mxu0 %v282
    %307 = vmatpush.msra.mxu0 %v281
    %308 = vmatpush.msra.mxu0 %v280
    %309 = vmatpush.msra.mxu0 %v279
    %310 = vmatpush.msra.mxu0 %v278
    %311 = vmatmul.f32.gmra.mxu0 %v276
    %v312 = vpop.f32.mrf.mxu0
    %v313 = vadd.f32 %v294, %v312
    %314 = vdwg.mxu0
    %315 = vst [vmem:[%s3] sm:$0xff] %v313
    // Predicated region
    $region26: #{mlp_forward.1} parent=1 // pred_check
      _
    $region27: #{mlp_forward.1} parent=1 // pred_check_branch
      %317 = sbr.rel (0) target = $region29
    $region28: #{mlp_forward.1} parent=1 // pred_region
      _
    $region29: #{mlp_forward.1} parent=1 // pred_fallthru
      _
    // Predicated region
    $region30: #{mlp_forward.1} parent=1 // pred_check
      _
    $region31: #{mlp_forward.1} parent=1 // pred_check_branch
      %319 = sbr.rel (0) target = $region33
    $region32: #{mlp_forward.1} parent=1 // pred_region
      _
    $region33: #{mlp_forward.1} parent=1 // pred_fallthru
      _
    %320 = vsyncpa [#allocation3], 1
    %321 = vsyncpa [#allocation5], 1

</llo_original>
